<compile_context>
chip_gen: v7x
topology: tpu7x:2x2x1
jax: 0.10.0
libtpu: 0.0.40
codegen_flags: <defaults>
</compile_context>

<pallas_src>
import functools

import jax
import jax.numpy as jnp
from jax.experimental import pallas as pl
from jax.experimental.pallas import tpu as pltpu


def _round_up(x, m):
    return (x + m - 1) // m * m


def _label_smoothing_kernel(pred_ref, tgt_ref, out_ref, *,
                            n_valid, n_classes, confidence, smoothing, tn):
    i = pl.program_id(0)

    # Native-dtype tile from HBM; upcast in-register (cheap VPU work).
    logits = pred_ref[...].astype(jnp.float32)                 # (tn, C)
    rows, c = logits.shape

    # Numerically stable log-softmax pieces; Mosaic masks the ragged class
    # lanes (C not a multiple of 128) inside the reductions.
    m = jnp.max(logits, axis=-1, keepdims=True)                # (tn, 1)
    shifted = logits - m                                       # (tn, C)
    lse = jnp.log(jnp.sum(jnp.exp(shifted), axis=-1, keepdims=True))

    # loss_row = -(s * sum_c logp_c + (conf - s) * logp[target]),
    # with sum_c logp_c = sum_c shifted_c - C * lse.
    sum_logp = (jnp.sum(shifted, axis=-1, keepdims=True)
                - jnp.float32(n_classes) * lse)                # (tn, 1)

    tgt = tgt_ref[...]                                         # (tn, 1) int32
    cls_ids = jax.lax.broadcasted_iota(jnp.int32, (rows, c), 1)
    logp_tgt = (jnp.sum(jnp.where(cls_ids == tgt, shifted, 0.0),
                        axis=-1, keepdims=True)
                - lse)                                         # (tn, 1)

    smooth_val = jnp.float32(smoothing / (n_classes - 1))
    row_loss = -(smooth_val * sum_logp
                 + (jnp.float32(confidence) - smooth_val) * logp_tgt)

    # Mask rows past the true batch (ragged last block).  This is a select,
    # so garbage / NaN in boundary rows cannot propagate.
    row_ids = i * tn + jax.lax.broadcasted_iota(jnp.int32, (rows, 1), 0)
    row_loss = jnp.where(row_ids < n_valid, row_loss, 0.0)

    # Per-block partial sum, broadcast into a lane-aligned (8, 128) tile so
    # the store is a plain unmasked vst and the grid axis can stay
    # "parallel" (v7x megacore).  The wrapper reads [:, 0, 0].
    out_ref[...] = jnp.full(out_ref.shape, jnp.sum(row_loss),
                            dtype=jnp.float32)


def label_smoothing_loss(pred, target, classes, smoothing=0.1):
    """pred: (N, classes) logits (any float dtype); target: (N,) int labels."""
    confidence = 1.0 - smoothing
    n, c = pred.shape
    assert c == classes

    itemsize = jnp.dtype(pred.dtype).itemsize
    c_lanes = _round_up(c, 128)            # physical VMEM lanes per row
    mult = 8 * max(1, 4 // itemsize)       # sublane packing: 8 f32 / 16 bf16

    tgt = target.astype(jnp.int32).reshape(n, 1)
    if n < mult:                           # tiny batches only: negligible pad
        pred = jnp.pad(pred, ((0, mult - n), (0, 0)))
        tgt = jnp.pad(tgt, ((0, mult - n), (0, 0)))
    n_rows = max(n, mult)

    # Row tile: ~4 MiB per logits input buffer, bounded by a v7x-safe VMEM
    # budget (double-buffered logits, 128-lane-padded (tn,1) targets, ~5 f32
    # (tn, C) in-kernel temporaries), capped at 8192 rows.
    tn_bw = (4 * 1024 * 1024) // (c_lanes * itemsize)
    bytes_per_row = 2 * c_lanes * itemsize + 2 * 128 * 4 + 5 * c_lanes * 4
    tn_vmem = (40 * 1024 * 1024) // bytes_per_row
    tn = min(tn_bw, tn_vmem, 8192, n_rows)
    tn = max(mult, tn // mult * mult)

    grid = (pl.cdiv(n_rows, tn),)

    kernel = functools.partial(
        _label_smoothing_kernel,
        n_valid=n, n_classes=c, confidence=confidence,
        smoothing=smoothing, tn=tn)

    partials = pl.pallas_call(
        kernel,
        out_shape=jax.ShapeDtypeStruct((grid[0], 8, 128), jnp.float32),
        grid_spec=pltpu.PrefetchScalarGridSpec(
            num_scalar_prefetch=0,
            grid=grid,
            in_specs=[
                pl.BlockSpec((tn, c), lambda i: (i, 0)),   # logits tile
                pl.BlockSpec((tn, 1), lambda i: (i, 0)),   # target tile
            ],
            out_specs=pl.BlockSpec((1, 8, 128), lambda i: (i, 0, 0)),
        ),
        compiler_params=pltpu.CompilerParams(
            dimension_semantics=("parallel",),
            vmem_limit_bytes=48 * 1024 * 1024,
        ),
    )(pred, tgt)

    return jnp.sum(partials[:, 0, 0]) / jnp.float32(n)


def _ref_loss(pred, target, classes, smoothing=0.1):
    logp = jax.nn.log_softmax(pred.astype(jnp.float32), axis=-1)
    true_dist = jnp.full(pred.shape, smoothing / (classes - 1), jnp.float32)
    true_dist = true_dist.at[jnp.arange(pred.shape[0]), target].set(1.0 - smoothing)
    return jnp.mean(jnp.sum(-true_dist * logp, axis=-1))


if __name__ == "__main__":
    key = jax.random.PRNGKey(0)
    k1, k2, k3, k4 = jax.random.split(key, 4)

    C = 100  # CIFAR-100 class count

    # Aligned small batch.
    N = 8
    pred = jax.random.normal(k1, (N, C), dtype=jnp.float32)
    target = jax.random.randint(k2, (N,), 0, C, dtype=jnp.int32)
    loss = jax.block_until_ready(
        label_smoothing_loss(pred, target, classes=C, smoothing=0.1))
    ref = _ref_loss(pred, target, C, 0.1)
    assert jnp.allclose(loss, ref, atol=1e-4, rtol=1e-5), (loss, ref)

    # Ragged batch (not a multiple of the row tile): exercises the
    # boundary-block path and the in-kernel row mask.
    N2 = 20
    pred2 = jax.random.normal(k3, (N2, C), dtype=jnp.float32)
    target2 = jax.random.randint(k4, (N2,), 0, C, dtype=jnp.int32)
    loss2 = jax.block_until_ready(
        label_smoothing_loss(pred2, target2, classes=C, smoothing=0.1))
    ref2 = _ref_loss(pred2, target2, C, 0.1)
    assert jnp.allclose(loss2, ref2, atol=1e-4, rtol=1e-5), (loss2, ref2)

    print("KERNEL_OK")
</pallas_src>

<mosaic_0001>
module attributes {stable_mosaic.version = 11 : i64} {
  func.func @_label_smoothing_kernel(%arg0: i32, %arg1: memref<8x100xf32, #tpu.memory_space<vmem>>, %arg2: memref<8x1xi32, #tpu.memory_space<vmem>>, %arg3: memref<1x8x128xf32, #tpu.memory_space<vmem>>) attributes {dimension_semantics = [#tpu.dimension_semantics<parallel>], iteration_bounds = array<i64: 1>, scalar_prefetch = 0 : i64, scratch_operands = 0 : i64, tpu.core_type = #tpu.core_type<tc>, window_params = [{transform_indices = @transform_0, window_bounds = array<i64: 8, 100>}, {transform_indices = @transform_1, window_bounds = array<i64: 8, 1>}, {transform_indices = @transform_2, window_bounds = array<i64: 1, 8, 128>}]} {
    %c0 = arith.constant 0 : index
    %c0_0 = arith.constant 0 : index
    %0 = vector.load %arg1[%c0, %c0_0] : memref<8x100xf32, #tpu.memory_space<vmem>>, vector<8x100xf32>
    %cst = arith.constant dense<0xFF800000> : vector<8xf32>
    %1 = vector.multi_reduction <maximumf>, %0, %cst [1] : vector<8x100xf32> to vector<8xf32>
    %2 = vector.shape_cast %1 : vector<8xf32> to vector<8x1xf32>
    %3 = vector.broadcast %2 : vector<8x1xf32> to vector<8x100xf32>
    %4 = arith.subf %0, %3 : vector<8x100xf32>
    %5 = math.exp %4 : vector<8x100xf32>
    %cst_1 = arith.constant dense<0.000000e+00> : vector<8xf32>
    %6 = vector.multi_reduction <add>, %5, %cst_1 [1] : vector<8x100xf32> to vector<8xf32>
    %7 = vector.shape_cast %6 : vector<8xf32> to vector<8x1xf32>
    %8 = math.log %7 : vector<8x1xf32>
    %cst_2 = arith.constant dense<0.000000e+00> : vector<8xf32>
    %9 = vector.multi_reduction <add>, %4, %cst_2 [1] : vector<8x100xf32> to vector<8xf32>
    %10 = vector.shape_cast %9 : vector<8xf32> to vector<8x1xf32>
    %cst_3 = arith.constant 1.000000e+02 : f32
    %11 = vector.broadcast %cst_3 : f32 to vector<8x1xf32>
    %12 = arith.mulf %11, %8 : vector<8x1xf32>
    %13 = arith.subf %10, %12 : vector<8x1xf32>
    %c0_4 = arith.constant 0 : index
    %c0_5 = arith.constant 0 : index
    %14 = vector.load %arg2[%c0_4, %c0_5] : memref<8x1xi32, #tpu.memory_space<vmem>>, vector<8x1xi32>
    %15 = tpu.iota {dimensions = array<i32: 1>} : vector<8x100xi32>
    %16 = vector.broadcast %14 : vector<8x1xi32> to vector<8x100xi32>
    %17 = arith.cmpi eq, %15, %16 : vector<8x100xi32>
    %cst_6 = arith.constant 0.000000e+00 : f32
    %18 = vector.broadcast %cst_6 : f32 to vector<8x100xf32>
    %19 = arith.select %17, %4, %18 : vector<8x100xi1>, vector<8x100xf32>
    %cst_7 = arith.constant dense<0.000000e+00> : vector<8xf32>
    %20 = vector.multi_reduction <add>, %19, %cst_7 [1] : vector<8x100xf32> to vector<8xf32>
    %21 = vector.shape_cast %20 : vector<8xf32> to vector<8x1xf32>
    %22 = arith.subf %21, %8 : vector<8x1xf32>
    %cst_8 = arith.constant 0.00101010106 : f32
    %23 = vector.broadcast %cst_8 : f32 to vector<8x1xf32>
    %24 = arith.mulf %23, %13 : vector<8x1xf32>
    %cst_9 = arith.constant 0.899999976 : f32
    %cst_10 = arith.constant 0.00101010106 : f32
    %25 = arith.subf %cst_9, %cst_10 : f32
    %26 = vector.broadcast %25 : f32 to vector<8x1xf32>
    %27 = arith.mulf %26, %22 : vector<8x1xf32>
    %28 = arith.addf %24, %27 : vector<8x1xf32>
    %cst_11 = arith.constant 0.000000e+00 : f32
    %29 = vector.broadcast %cst_11 : f32 to vector<8x1xf32>
    %30 = arith.subf %29, %28 : vector<8x1xf32>
    %c8_i32 = arith.constant 8 : i32
    %31 = arith.muli %arg0, %c8_i32 : i32
    %32 = tpu.iota {dimensions = array<i32: 0>} : vector<8x1xi32>
    %33 = vector.broadcast %31 : i32 to vector<8x1xi32>
    %34 = arith.addi %33, %32 : vector<8x1xi32>
    %c8_i32_12 = arith.constant 8 : i32
    %35 = vector.broadcast %c8_i32_12 : i32 to vector<8x1xi32>
    %36 = arith.cmpi slt, %34, %35 : vector<8x1xi32>
    %cst_13 = arith.constant 0.000000e+00 : f32
    %37 = vector.broadcast %cst_13 : f32 to vector<8x1xf32>
    %38 = arith.select %36, %30, %37 : vector<8x1xi1>, vector<8x1xf32>
    %39 = vector.shape_cast %38 : vector<8x1xf32> to vector<1x8x1xf32>
    %cst_14 = arith.constant dense<0.000000e+00> : vector<1xf32>
    %40 = vector.multi_reduction <add>, %39, %cst_14 [1, 2] : vector<1x8x1xf32> to vector<1xf32>
    %41 = vector.shape_cast %40 : vector<1xf32> to vector<1x1x1xf32>
    %42 = vector.extract %41[0, 0, 0] : f32 from vector<1x1x1xf32>
    %43 = vector.broadcast %42 : f32 to vector<1x8x128xf32>
    %c0_15 = arith.constant 0 : index
    %c0_16 = arith.constant 0 : index
    %c0_17 = arith.constant 0 : index
    %44 = vector.load %arg3[%c0_15, %c0_16, %c0_17] : memref<1x8x128xf32, #tpu.memory_space<vmem>>, vector<1x8x128xf32>
    tpu.vector_store %arg3[%c0_15, %c0_16, %c0_17], %43 {strides = array<i32>} : memref<1x8x128xf32, #tpu.memory_space<vmem>>, vector<1x8x128xf32>,
    return
  }
  func.func @transform_0(%arg0: i32) -> (i32, i32) {
    %c0_i32 = arith.constant 0 : i32
    %c0_i32_0 = arith.constant 0 : i32
    return %arg0, %c0_i32 : i32, i32
  }
  func.func @transform_1(%arg0: i32) -> (i32, i32) {
    %c0_i32 = arith.constant 0 : i32
    %c0_i32_0 = arith.constant 0 : i32
    return %arg0, %c0_i32 : i32, i32
  }
  func.func @transform_2(%arg0: i32) -> (i32, i32, i32) {
    %c0_i32 = arith.constant 0 : i32
    %c0_i32_0 = arith.constant 0 : i32
    %c0_i32_1 = arith.constant 0 : i32
    return %arg0, %c0_i32, %c0_i32_0 : i32, i32, i32
  }
}

</mosaic_0001>

<llo_original>
// kernel: tpu_custom_call.1
$region0: #{tpu_custom_call.1}
  #allocation0 [shape = 'u32[]', space=smem, size = 0x4, offset = 0x4, fixed_abs, tag = 'smem constant byte address 0x4 - core index']
  #allocation1 [shape = 'u32[144,128]{1,0:T(1,128)}', space=vmem, size = 0x12000, scoped, tag = 'internal scratch']
  %s0 = inlined_call_operand.vmem [shape: f32[8,100], index: 0, kind: input, shape index: {}]
  %s1 = inlined_call_operand.vmem [shape: s32[8,1], index: 1, kind: input, shape index: {}]
  %s2 = inlined_call_operand.hbm [shape: f32[1,8,128], index: 2, kind: output, shape index: {}]
  %s3 = sld [smem:[#allocation0]]
  $region18: #{tpu_custom_call.1} parent=0
    _
  %s5 = ssub.s32 1, %s3
  %s6 = scalar_select 0, %s5, %s3
  $region1: #{tpu_custom_call.1} parent=0
    #allocation2 [shape = 'u8[4096]{0}', space=vmem, size = 0x1000, scoped, tag = 'output window, operand 0, single buffered']
    #allocation3 [shape = 's32[1]{0}', space=sflag, size = 0x4, scoped, tag = 'scoped memory for tpu_custom_call.1']
    %7 = vsyncpa [#allocation3], 0
    // Predicated region
    $region2: #{tpu_custom_call.1} parent=1 // pred_check
      _
    $region3: #{tpu_custom_call.1} parent=1 // pred_check_branch
      %9 = sbr.rel (0) target = $region5
    $region4: #{tpu_custom_call.1} parent=1 // pred_region
      _
    $region5: #{tpu_custom_call.1} parent=1 // pred_fallthru
      _
    // Predicated region
    $region6: #{tpu_custom_call.1} parent=1 // pred_check
      _
    $region7: #{tpu_custom_call.1} parent=1 // pred_check_branch
      %11 = sbr.rel (0) target = $region9
    $region8: #{tpu_custom_call.1} parent=1 // pred_region
      _
    $region9: #{tpu_custom_call.1} parent=1 // pred_fallthru
      _
    %v12 = vld [vmem:[%s0] sm:$0xff]
    %vm13 = vcmask 818176
    %v14 = vsel %vm13, %v12, -inf
    %15 = vmax.xlane.f32.xlu0 %v14
    %v16 = vpop.xlane.xlu0 %15
    %v17 = vsub.f32 %v12, %v16
    %v18 = vmul.f32 %v17, 1.442695
    %v19 = vpow.pop %v18
    %v20 = vsel %vm13, %v19, 0.0
    %21 = vadd.xlane.f32.xlu0 %v20
    %v22 = vpop.xlane.xlu0 %21
    %v23 = vlog2.pop %v22
    %v24 = vmul.f32 %v23, 0.6931472
    %v25 = vsel %vm13, %v17, 0.0
    %26 = vadd.xlane.f32.xlu0 %v25
    %v27 = vpop.xlane.xlu0 %26
    %v28 = vmul.f32 %v24, 100.0
    %v29 = vsub.f32 %v27, %v28
    %v30 = vld [vmem:[%s1] sm:$0xff]
    %v31 = vlaneseq
    %v32 = vand.u32 %v31, 127
    %33 = vset.pattern.permute.xlu0 0
    %34 = vperm.xlu0 %33, %v30
    %v35 = vpop.permute.xlu0 %34
    %vm36 = vcmp.eq.s32.totalorder %v32, %v35
    %v37 = vsel %vm36, %v17, 0.0
    %v38 = vsel %vm13, %v37, 0.0
    %39 = vadd.xlane.f32.xlu0 %v38
    %v40 = vpop.xlane.xlu0 %39
    %v41 = vsub.f32 %v40, %v24
    %v42 = vmul.f32 %v29, 0.001010101
    %v43 = vmul.f32 %v41, 0.89898986
    %v44 = vadd.f32 %v42, %v43
    %v45 = vsub.f32 0.0, %v44
    %s46 = smul.u32 0, 8
    %v47 = vlaneseq
    %v48 = vshrl.u32 %v47, 7
    %v49 = vstv %s46
    %v50 = vadd.s32 %v49, %v48
    %vm51 = vcmp.lt.s32.totalorder %v50, 8
    %v52 = vsel %vm51, %v45, 0.0
    %vm53 = vcmask 7168
    %v54 = vsel %vm53, %v52, 0.0
    %55 = vadd.xlane.f32.xlu0 %v54
    %v56 = vpop.xlane.xlu0 %55
    %v57 = vrot.slane %v56, 4
    %v58 = vadd.f32 %v56, %v57
    %v59 = vrot.slane %v58, 2
    %v60 = vadd.f32 %v58, %v59
    %v61 = vrot.slane %v60, 1
    %v62 = vadd.f32 %v60, %v61
    %s63 = vtos %v62
    %v64 = vstv %s63
    %65 = vst [vmem:[#allocation2] sm:$0xff] %v64
    // Predicated region
    $region10: #{tpu_custom_call.1} parent=1 // pred_check
      _
    $region11: #{tpu_custom_call.1} parent=1 // pred_check_branch
      %67 = sbr.rel (0) target = $region13
    $region12: #{tpu_custom_call.1} parent=1 // pred_region
      %s69 = ssub.s32 128, 128
      %70 = vsyncadd [#allocation3], %s69
      %s72 = sshll.u32 [#allocation2], 4
      %s73 = int_to_ptr.vmem [resolvable:$true] %s72
      %75 = dma.vmem_to_hbm [thread:$0]  %s73, 128, %s2, [#allocation3]
    $region13: #{tpu_custom_call.1} parent=1 // pred_fallthru
      _
    // Predicated region
    $region14: #{tpu_custom_call.1} parent=1 // pred_check
      _
    $region15: #{tpu_custom_call.1} parent=1 // pred_check_branch
      %77 = sbr.rel (0) target = $region17
    $region16: #{tpu_custom_call.1} parent=1 // pred_region
      %78 = dma.done [#allocation3], 128
    $region17: #{tpu_custom_call.1} parent=1 // pred_fallthru
      _
    %79 = vsyncpa [#allocation3], 1

</llo_original>
